<compile_context>
chip_gen: v6e
topology: v6e:2x2x1
jax: 0.10.0
libtpu: 0.0.40
codegen_flags: <defaults>
</compile_context>

<pallas_src>
import jax
import jax.numpy as jnp
from jax import lax
from jax.experimental import pallas as pl
from jax.experimental.pallas import tpu as pltpu

# Model dims from the PyTorch module
N_HIDDEN1 = 30
N_HIDDEN2 = 10
N_OUTPUT = 1

_LANE = 128  # TPU lane width


def _mlp_kernel(x_ref, w1_ref, b1_ref, w2_ref, b2_ref, w3_ref, b3_ref, o_ref):
    # x_ref: (TM, n_in) f32 natural layout ; w*: (out, in) f32 ; b*: (out, 1) f32
    x = x_ref[...]

    # Contract the feature axis of BOTH operands (w1 is (30, n_in), x is
    # (TM, n_in)) so the result is (30, TM): batch stays on the lane axis.
    h1 = lax.dot_general(w1_ref[...], x,
                         dimension_numbers=(((1,), (1,)), ((), ())),
                         preferred_element_type=jnp.float32)
    h1 = jnp.maximum(h1 + b1_ref[...], 0.0)                      # (30, TM)

    h2 = jnp.dot(w2_ref[...], h1, preferred_element_type=jnp.float32)
    h2 = jnp.maximum(h2 + b2_ref[...], 0.0)                      # (10, TM)

    z = jnp.dot(w3_ref[...], h2, preferred_element_type=jnp.float32)
    o_ref[...] = jax.nn.sigmoid(z + b3_ref[...])                 # (1, TM)


def _reference_forward(x, p):
    """Pure-JAX f32 reference (also the fast path for tiny batches)."""
    hp = jax.lax.Precision.HIGHEST
    h1 = jnp.maximum(jnp.dot(x, p["w1"].T, precision=hp) + p["b1"].T, 0.0)
    h2 = jnp.maximum(jnp.dot(h1, p["w2"].T, precision=hp) + p["b2"].T, 0.0)
    return jax.nn.sigmoid(jnp.dot(h2, p["w3"].T, precision=hp) + p["b3"].T)


def clf_model_forward(x, params, *, tm_max=4096, min_pallas_batch=512):
    """x: (batch, n_input_dim) float32 -> (batch, 1) float32 probabilities."""
    batch, n_in = x.shape

    if batch < min_pallas_batch:
        # pallas_call fixed cost + one grid step exceeds XLA's fused tiny-GEMM
        # path at small batch sizes -> route to the reference implementation.
        return _reference_forward(x, params)

    w1, b1 = params["w1"], params["b1"]
    w2, b2 = params["w2"], params["b2"]
    w3, b3 = params["w3"], params["b3"]

    # Tile selection: multiple of 128 lanes, capped at tm_max, and capped at
    # ~half the (lane-rounded) batch so the grid keeps >= 2 steps -> v7x can
    # shard the "parallel" batch axis across both TensorCores.  No explicit
    # padding: Pallas handles the ragged last block; garbage columns there
    # are never written back to the real (1, batch) output.
    lanes = pl.cdiv(batch, _LANE) * _LANE
    half = pl.cdiv(pl.cdiv(lanes, 2), _LANE) * _LANE
    tm = max(_LANE, min(tm_max, half))
    grid = pl.cdiv(batch, tm)

    def const(shape):  # resident operand: same block every grid step -> no re-DMA
        return pl.BlockSpec(shape, lambda i: (0, 0))

    flops = 2 * batch * (n_in * N_HIDDEN1
                         + N_HIDDEN1 * N_HIDDEN2
                         + N_HIDDEN2 * N_OUTPUT)
    bytes_accessed = (x.size * 4
                      + (w1.size + w2.size + w3.size) * 4
                      + (b1.size + b2.size + b3.size) * 4
                      + batch * N_OUTPUT * 4)

    out_t = pl.pallas_call(
        _mlp_kernel,
        out_shape=jax.ShapeDtypeStruct((N_OUTPUT, batch), jnp.float32),
        grid=(grid,),
        in_specs=[
            pl.BlockSpec((tm, n_in), lambda i: (i, 0)),   # streamed batch tiles
            const(w1.shape), const(b1.shape),
            const(w2.shape), const(b2.shape),
            const(w3.shape), const(b3.shape),
        ],
        out_specs=pl.BlockSpec((N_OUTPUT, tm), lambda i: (0, i)),
        compiler_params=pltpu.CompilerParams(
            dimension_semantics=("parallel",)),           # megacore on v7x
        cost_estimate=pl.CostEstimate(
            flops=flops,
            transcendentals=batch * N_OUTPUT,             # sigmoid
            bytes_accessed=bytes_accessed),
    )(x, w1, b1, w2, b2, w3, b3)

    return out_t.T                                        # (batch, 1) f32


def init_params(key, n_input_dim):
    """Deterministic synthetic init. Weights in PyTorch (out, in) layout,
    biases as (out, 1) so they broadcast along lanes inside the kernel."""
    ks = jax.random.split(key, 6)
    scale = 0.1
    w1 = scale * jax.random.normal(ks[0], (N_HIDDEN1, n_input_dim), jnp.float32)
    b1 = scale * jax.random.normal(ks[1], (N_HIDDEN1, 1), jnp.float32)
    w2 = scale * jax.random.normal(ks[2], (N_HIDDEN2, N_HIDDEN1), jnp.float32)
    b2 = scale * jax.random.normal(ks[3], (N_HIDDEN2, 1), jnp.float32)
    w3 = scale * jax.random.normal(ks[4], (N_OUTPUT, N_HIDDEN2), jnp.float32)
    b3 = scale * jax.random.normal(ks[5], (N_OUTPUT, 1), jnp.float32)
    return dict(w1=w1, b1=b1, w2=w2, b2=b2, w3=w3, b3=b3)


if __name__ == "__main__":
    key = jax.random.PRNGKey(0)
    k_x, k_p = jax.random.split(key)

    n_input_dim = 16    # X_train.shape[1] analogue
    params = init_params(k_p, n_input_dim)

    # Pallas path: batch not a multiple of the tile -> exercises the ragged
    # last block (tm = 512, grid = 2).
    batch = 1000
    x = jax.random.normal(k_x, (batch, n_input_dim), jnp.float32)
    out = jax.block_until_ready(clf_model_forward(x, params))

    ref = _reference_forward(x, params)
    assert out.shape == (batch, N_OUTPUT)
    # Full f32 chain -> tight tolerance on [0, 1] probabilities.
    assert jnp.allclose(out, ref, atol=2e-3, rtol=0.0), float(
        jnp.max(jnp.abs(out - ref)))

    # Small-batch fast path (routed to pure JAX, no Pallas overhead).
    x_small = jax.random.normal(k_x, (8, n_input_dim), jnp.float32)
    out_small = jax.block_until_ready(clf_model_forward(x_small, params))
    assert out_small.shape == (8, N_OUTPUT)

    print("KERNEL_OK")
</pallas_src>

<mosaic_0001>
module attributes {stable_mosaic.version = 11 : i64} {
  func.func @_mlp_kernel(%arg0: i32, %arg1: memref<512x16xf32, #tpu.memory_space<vmem>>, %arg2: memref<30x16xf32, #tpu.memory_space<vmem>>, %arg3: memref<30x1xf32, #tpu.memory_space<vmem>>, %arg4: memref<10x30xf32, #tpu.memory_space<vmem>>, %arg5: memref<10x1xf32, #tpu.memory_space<vmem>>, %arg6: memref<1x10xf32, #tpu.memory_space<vmem>>, %arg7: memref<1x1xf32, #tpu.memory_space<vmem>>, %arg8: memref<1x512xf32, #tpu.memory_space<vmem>>) attributes {dimension_semantics = [#tpu.dimension_semantics<parallel>], iteration_bounds = array<i64: 2>, scalar_prefetch = 0 : i64, scratch_operands = 0 : i64, tpu.core_type = #tpu.core_type<tc>, window_params = [{transform_indices = @transform_0, window_bounds = array<i64: 512, 16>}, {pipeline_mode = #tpu.pipeline_mode<synchronous>, transform_indices = @transform_1, window_bounds = array<i64: 30, 16>}, {pipeline_mode = #tpu.pipeline_mode<synchronous>, transform_indices = @transform_2, window_bounds = array<i64: 30, 1>}, {pipeline_mode = #tpu.pipeline_mode<synchronous>, transform_indices = @transform_3, window_bounds = array<i64: 10, 30>}, {pipeline_mode = #tpu.pipeline_mode<synchronous>, transform_indices = @transform_4, window_bounds = array<i64: 10, 1>}, {pipeline_mode = #tpu.pipeline_mode<synchronous>, transform_indices = @transform_5, window_bounds = array<i64: 1, 10>}, {pipeline_mode = #tpu.pipeline_mode<synchronous>, transform_indices = @transform_6, window_bounds = array<i64: 1, 1>}, {transform_indices = @transform_7, window_bounds = array<i64: 1, 512>}]} {
    %c0 = arith.constant 0 : index
    %c0_0 = arith.constant 0 : index
    %0 = vector.load %arg1[%c0, %c0_0] : memref<512x16xf32, #tpu.memory_space<vmem>>, vector<512x16xf32>
    %c0_1 = arith.constant 0 : index
    %c0_2 = arith.constant 0 : index
    %1 = vector.load %arg2[%c0_1, %c0_2] : memref<30x16xf32, #tpu.memory_space<vmem>>, vector<30x16xf32>
    %cst = arith.constant dense<0.000000e+00> : vector<30x512xf32>
    %2 = tpu.matmul %1, %0, %cst {dimension_numbers = #tpu.dot_dimension_numbers<[1], [1], [0], [0], [0, 0, 1, 0], [], []>} : vector<30x16xf32>, vector<512x16xf32>, vector<30x512xf32> -> vector<30x512xf32>
    %c0_3 = arith.constant 0 : index
    %c0_4 = arith.constant 0 : index
    %3 = vector.load %arg3[%c0_3, %c0_4] : memref<30x1xf32, #tpu.memory_space<vmem>>, vector<30x1xf32>
    %4 = vector.broadcast %3 : vector<30x1xf32> to vector<30x512xf32>
    %5 = arith.addf %2, %4 : vector<30x512xf32>
    %cst_5 = arith.constant 0.000000e+00 : f32
    %6 = vector.broadcast %cst_5 : f32 to vector<30x512xf32>
    %7 = arith.maximumf %5, %6 : vector<30x512xf32>
    %c0_6 = arith.constant 0 : index
    %c0_7 = arith.constant 0 : index
    %8 = vector.load %arg4[%c0_6, %c0_7] : memref<10x30xf32, #tpu.memory_space<vmem>>, vector<10x30xf32>
    %cst_8 = arith.constant dense<0.000000e+00> : vector<10x512xf32>
    %9 = tpu.matmul %8, %7, %cst_8 {dimension_numbers = #tpu.dot_dimension_numbers<[1], [0], [0], [1], [0, 0, 1, 1], [], []>} : vector<10x30xf32>, vector<30x512xf32>, vector<10x512xf32> -> vector<10x512xf32>
    %c0_9 = arith.constant 0 : index
    %c0_10 = arith.constant 0 : index
    %10 = vector.load %arg5[%c0_9, %c0_10] : memref<10x1xf32, #tpu.memory_space<vmem>>, vector<10x1xf32>
    %11 = vector.broadcast %10 : vector<10x1xf32> to vector<10x512xf32>
    %12 = arith.addf %9, %11 : vector<10x512xf32>
    %cst_11 = arith.constant 0.000000e+00 : f32
    %13 = vector.broadcast %cst_11 : f32 to vector<10x512xf32>
    %14 = arith.maximumf %12, %13 : vector<10x512xf32>
    %c0_12 = arith.constant 0 : index
    %c0_13 = arith.constant 0 : index
    %15 = vector.load %arg6[%c0_12, %c0_13] : memref<1x10xf32, #tpu.memory_space<vmem>>, vector<1x10xf32>
    %cst_14 = arith.constant dense<0.000000e+00> : vector<1x512xf32>
    %16 = tpu.matmul %15, %14, %cst_14 {dimension_numbers = #tpu.dot_dimension_numbers<[1], [0], [0], [1], [0, 0, 1, 1], [], []>} : vector<1x10xf32>, vector<10x512xf32>, vector<1x512xf32> -> vector<1x512xf32>
    %c0_15 = arith.constant 0 : index
    %c0_16 = arith.constant 0 : index
    %17 = vector.load %arg7[%c0_15, %c0_16] : memref<1x1xf32, #tpu.memory_space<vmem>>, vector<1x1xf32>
    %18 = vector.broadcast %17 : vector<1x1xf32> to vector<1x512xf32>
    %19 = arith.addf %16, %18 : vector<1x512xf32>
    %20 = arith.negf %19 : vector<1x512xf32>
    %21 = math.exp %20 : vector<1x512xf32>
    %cst_17 = arith.constant 1.000000e+00 : f32
    %22 = vector.broadcast %cst_17 : f32 to vector<1x512xf32>
    %23 = arith.addf %22, %21 : vector<1x512xf32>
    %24 = arith.divf %22, %23 : vector<1x512xf32>
    %c0_18 = arith.constant 0 : index
    %c0_19 = arith.constant 0 : index
    %25 = vector.load %arg8[%c0_18, %c0_19] : memref<1x512xf32, #tpu.memory_space<vmem>>, vector<1x512xf32>
    tpu.vector_store %arg8[%c0_18, %c0_19], %24 {strides = array<i32>} : memref<1x512xf32, #tpu.memory_space<vmem>>, vector<1x512xf32>,
    return
  }
  func.func @transform_0(%arg0: i32) -> (i32, i32) {
    %c0_i32 = arith.constant 0 : i32
    %c0_i32_0 = arith.constant 0 : i32
    return %arg0, %c0_i32 : i32, i32
  }
  func.func @transform_1(%arg0: i32) -> (i32, i32) {
    %c0_i32 = arith.constant 0 : i32
    %c0_i32_0 = arith.constant 0 : i32
    %c0_i32_1 = arith.constant 0 : i32
    return %c0_i32, %c0_i32_0 : i32, i32
  }
  func.func @transform_2(%arg0: i32) -> (i32, i32) {
    %c0_i32 = arith.constant 0 : i32
    %c0_i32_0 = arith.constant 0 : i32
    %c0_i32_1 = arith.constant 0 : i32
    return %c0_i32, %c0_i32_0 : i32, i32
  }
  func.func @transform_3(%arg0: i32) -> (i32, i32) {
    %c0_i32 = arith.constant 0 : i32
    %c0_i32_0 = arith.constant 0 : i32
    %c0_i32_1 = arith.constant 0 : i32
    return %c0_i32, %c0_i32_0 : i32, i32
  }
  func.func @transform_4(%arg0: i32) -> (i32, i32) {
    %c0_i32 = arith.constant 0 : i32
    %c0_i32_0 = arith.constant 0 : i32
    %c0_i32_1 = arith.constant 0 : i32
    return %c0_i32, %c0_i32_0 : i32, i32
  }
  func.func @transform_5(%arg0: i32) -> (i32, i32) {
    %c0_i32 = arith.constant 0 : i32
    %c0_i32_0 = arith.constant 0 : i32
    %c0_i32_1 = arith.constant 0 : i32
    return %c0_i32, %c0_i32_0 : i32, i32
  }
  func.func @transform_6(%arg0: i32) -> (i32, i32) {
    %c0_i32 = arith.constant 0 : i32
    %c0_i32_0 = arith.constant 0 : i32
    %c0_i32_1 = arith.constant 0 : i32
    return %c0_i32, %c0_i32_0 : i32, i32
  }
  func.func @transform_7(%arg0: i32) -> (i32, i32) {
    %c0_i32 = arith.constant 0 : i32
    %c0_i32_0 = arith.constant 0 : i32
    return %c0_i32, %arg0 : i32, i32
  }
}

</mosaic_0001>

<llo_original>
// kernel: tpu_custom_call.1
$region0: #{tpu_custom_call.1}
  #allocation0 [shape = 'u32[]', space=smem, size = 0x4, offset = 0x4, fixed_abs, tag = 'smem constant byte address 0x4 - core index']
  #allocation1 [shape = 'u32[144,128]{1,0:T(1,128)}', space=vmem, size = 0x12000, scoped, tag = 'internal scratch']
  #allocation2 [shape = 'f32[1,1]{1,0:T(1,128)S(1)}', space=vmem, size = 0x200, scoped, tag = 'scoped memory for tpu_custom_call.1']
  %s0 = inlined_call_operand.vmem [shape: f32[1000,16], index: 0, kind: input, shape index: {}]
  %s1 = inlined_call_operand.vmem [shape: f32[30,16], index: 1, kind: input, shape index: {}]
  %s2 = inlined_call_operand.vmem [shape: f32[30,1], index: 2, kind: input, shape index: {}]
  %s3 = inlined_call_operand.vmem [shape: f32[10,30], index: 3, kind: input, shape index: {}]
  %s4 = inlined_call_operand.vmem [shape: f32[10,1], index: 4, kind: input, shape index: {}]
  %s5 = inlined_call_operand.vmem [shape: f32[1,10], index: 5, kind: input, shape index: {}]
  %s6 = inlined_call_operand.<no memory space> [shape: f32[1,1], index: 6, kind: input, shape index: {}]
  %s7 = inlined_call_operand.hbm [shape: f32[1,1000], index: 7, kind: output, shape index: {}]
  %s8 = sld [smem:[#allocation0]]
  $region61: #{tpu_custom_call.1} parent=0
    _
  %s10 = ssub.s32 1, %s8
  %s11 = scalar_select 0, %s10, %s8
  %v12 = vstv %s6
  %13 = vst [vmem:[#allocation2] sm:$0x1] %v12
  $region1: #{tpu_custom_call.1} parent=0
    #allocation3 [shape = 'u8[4096]{0}', space=vmem, size = 0x1000, scoped, tag = 'output window, operand 0']
    #allocation4 [shape = 's32[2]{0}', space=sflag, size = 0x8, scoped, tag = 'scoped memory for tpu_custom_call.1']
    %14 = vsyncpa [#allocation4], 0
    %s15 = scalar_lea.sflag [#allocation4], 1
    %16 = vsyncpa %s15, 0
    loop: start=0, step=1, limit=4
    $region2: #{tpu_custom_call.1} parent=1 // loop_pre_header
      _
    $region3: #{tpu_custom_call.1} parent=1 // loop_header
      %s18 = sphi 0, %s22
      %p19 = scmp.ge.s32.totalorder %s18, 4
      %s28 = sphi 0, %s30
      %s31 = sphi 0, %s28
      %s32 = sphi 0, %s31
      %s48 = sphi 0, %s32
      %s52 = sphi 0, %s52
      %s54 = sphi 0, %s52
      %s55 = sphi 0, %s54
      %s69 = sphi 0, %s55
      %s73 = sphi 0, %s73
      %s75 = sphi 0, %s73
      %s76 = sphi 0, %s75
      %s90 = sphi 0, %s76
      %s94 = sphi 0, %s94
      %s96 = sphi 0, %s94
      %s97 = sphi 0, %s96
      %s111 = sphi 0, %s97
      %s115 = sphi 0, %s115
      %s117 = sphi 0, %s115
      %s118 = sphi 0, %s117
      %s132 = sphi 0, %s118
      %s136 = sphi 0, %s136
      %s138 = sphi 0, %s136
      %s139 = sphi 0, %s138
      %s153 = sphi 0, %s139
      %s157 = sphi 0, %s157
      %s159 = sphi 0, %s157
      %s160 = sphi 0, %s159
      %s174 = sphi 0, %s160
      %s180 = sphi 0, %s182
      %s183 = sphi 0, %s180
      %s184 = sphi 0, %s183
      %s200 = sphi 0, %s184
    $region4: #{tpu_custom_call.1} parent=1 // loop_header_branch
      %21 = sbr.rel (%p19) target = $region8
    $region5: #{tpu_custom_call.1} parent=1 // loop_body
      %s23 = ssub.s32 %s18, 1
      %s24 = ssub.s32 %s18, 2
      %s25 = sadd.s32 %s18, 1
      %s26 = ssub.s32 %s18, %s25
      %p27 = scmp.eq.s32.totalorder %s26, 0
      %s29 = sadd.s32 %s28, 1
      %s30 = scalar_select %p27, %s28, %s29
      %p33 = pneg %p27
      %p34 = scmp.eq.s32.totalorder %s18, 1
      %p35 = por %p33, %p34
      %p36 = scmp.ne.s32.totalorder %s28, %s31
      %p37 = scmp.eq.s32.totalorder %s18, 0
      %p38 = por %p36, %p37
      %p39 = scmp.ne.s32.totalorder %s28, %s31
      %p40 = scmp.eq.s32.totalorder %s23, 1
      %p41 = por %p39, %p40
      %p42 = scmp.ne.s32.totalorder %s31, %s32
      %p43 = scmp.eq.s32.totalorder %s23, 0
      %p44 = por %p42, %p43
      %p45 = scmp.ne.s32.totalorder %s31, %s32
      %p46 = scmp.eq.s32.totalorder %s24, 1
      %p47 = por %p45, %p46
      %p49 = scmp.ne.s32.totalorder %s32, %s48
      %p50 = scmp.eq.s32.totalorder %s24, 0
      %p51 = por %p49, %p50
      %s53 = sadd.s32 %s52, 1
      %p56 = scmp.eq.s32.totalorder %s18, 1
      %p57 = scmp.ne.s32.totalorder %s52, %s54
      %p58 = scmp.eq.s32.totalorder %s18, 0
      %p59 = por %p57, %p58
      %p60 = scmp.ne.s32.totalorder %s52, %s54
      %p61 = scmp.eq.s32.totalorder %s23, 1
      %p62 = por %p60, %p61
      %p63 = scmp.ne.s32.totalorder %s54, %s55
      %p64 = scmp.eq.s32.totalorder %s23, 0
      %p65 = por %p63, %p64
      %p66 = scmp.ne.s32.totalorder %s54, %s55
      %p67 = scmp.eq.s32.totalorder %s24, 1
      %p68 = por %p66, %p67
      %p70 = scmp.ne.s32.totalorder %s55, %s69
      %p71 = scmp.eq.s32.totalorder %s24, 0
      %p72 = por %p70, %p71
      %s74 = sadd.s32 %s73, 1
      %p77 = scmp.eq.s32.totalorder %s18, 1
      %p78 = scmp.ne.s32.totalorder %s73, %s75
      %p79 = scmp.eq.s32.totalorder %s18, 0
      %p80 = por %p78, %p79
      %p81 = scmp.ne.s32.totalorder %s73, %s75
      %p82 = scmp.eq.s32.totalorder %s23, 1
      %p83 = por %p81, %p82
      %p84 = scmp.ne.s32.totalorder %s75, %s76
      %p85 = scmp.eq.s32.totalorder %s23, 0
      %p86 = por %p84, %p85
      %p87 = scmp.ne.s32.totalorder %s75, %s76
      %p88 = scmp.eq.s32.totalorder %s24, 1
      %p89 = por %p87, %p88
      %p91 = scmp.ne.s32.totalorder %s76, %s90
      %p92 = scmp.eq.s32.totalorder %s24, 0
      %p93 = por %p91, %p92
      %s95 = sadd.s32 %s94, 1
      %p98 = scmp.eq.s32.totalorder %s18, 1
      %p99 = scmp.ne.s32.totalorder %s94, %s96
      %p100 = scmp.eq.s32.totalorder %s18, 0
      %p101 = por %p99, %p100
      %p102 = scmp.ne.s32.totalorder %s94, %s96
      %p103 = scmp.eq.s32.totalorder %s23, 1
      %p104 = por %p102, %p103
      %p105 = scmp.ne.s32.totalorder %s96, %s97
      %p106 = scmp.eq.s32.totalorder %s23, 0
      %p107 = por %p105, %p106
      %p108 = scmp.ne.s32.totalorder %s96, %s97
      %p109 = scmp.eq.s32.totalorder %s24, 1
      %p110 = por %p108, %p109
      %p112 = scmp.ne.s32.totalorder %s97, %s111
      %p113 = scmp.eq.s32.totalorder %s24, 0
      %p114 = por %p112, %p113
      %s116 = sadd.s32 %s115, 1
      %p119 = scmp.eq.s32.totalorder %s18, 1
      %p120 = scmp.ne.s32.totalorder %s115, %s117
      %p121 = scmp.eq.s32.totalorder %s18, 0
      %p122 = por %p120, %p121
      %p123 = scmp.ne.s32.totalorder %s115, %s117
      %p124 = scmp.eq.s32.totalorder %s23, 1
      %p125 = por %p123, %p124
      %p126 = scmp.ne.s32.totalorder %s117, %s118
      %p127 = scmp.eq.s32.totalorder %s23, 0
      %p128 = por %p126, %p127
      %p129 = scmp.ne.s32.totalorder %s117, %s118
      %p130 = scmp.eq.s32.totalorder %s24, 1
      %p131 = por %p129, %p130
      %p133 = scmp.ne.s32.totalorder %s118, %s132
      %p134 = scmp.eq.s32.totalorder %s24, 0
      %p135 = por %p133, %p134
      %s137 = sadd.s32 %s136, 1
      %p140 = scmp.eq.s32.totalorder %s18, 1
      %p141 = scmp.ne.s32.totalorder %s136, %s138
      %p142 = scmp.eq.s32.totalorder %s18, 0
      %p143 = por %p141, %p142
      %p144 = scmp.ne.s32.totalorder %s136, %s138
      %p145 = scmp.eq.s32.totalorder %s23, 1
      %p146 = por %p144, %p145
      %p147 = scmp.ne.s32.totalorder %s138, %s139
      %p148 = scmp.eq.s32.totalorder %s23, 0
      %p149 = por %p147, %p148
      %p150 = scmp.ne.s32.totalorder %s138, %s139
      %p151 = scmp.eq.s32.totalorder %s24, 1
      %p152 = por %p150, %p151
      %p154 = scmp.ne.s32.totalorder %s139, %s153
      %p155 = scmp.eq.s32.totalorder %s24, 0
      %p156 = por %p154, %p155
      %s158 = sadd.s32 %s157, 1
      %p161 = scmp.eq.s32.totalorder %s18, 1
      %p162 = scmp.ne.s32.totalorder %s157, %s159
      %p163 = scmp.eq.s32.totalorder %s18, 0
      %p164 = por %p162, %p163
      %p165 = scmp.ne.s32.totalorder %s157, %s159
      %p166 = scmp.eq.s32.totalorder %s23, 1
      %p167 = por %p165, %p166
      %p168 = scmp.ne.s32.totalorder %s159, %s160
      %p169 = scmp.eq.s32.totalorder %s23, 0
      %p170 = por %p168, %p169
      %p171 = scmp.ne.s32.totalorder %s159, %s160
      %p172 = scmp.eq.s32.totalorder %s24, 1
      %p173 = por %p171, %p172
      %p175 = scmp.ne.s32.totalorder %s160, %s174
      %p176 = scmp.eq.s32.totalorder %s24, 0
      %p177 = por %p175, %p176
      %s178 = ssub.s32 %s18, %s25
      %p179 = scmp.eq.s32.totalorder %s178, 0
      %s181 = sadd.s32 %s180, 1
      %s182 = scalar_select %p179, %s180, %s181
      %p185 = pneg %p179
      %p186 = scmp.eq.s32.totalorder %s18, 1
      %p187 = por %p185, %p186
      %p188 = scmp.ne.s32.totalorder %s180, %s183
      %p189 = scmp.eq.s32.totalorder %s18, 0
      %p190 = por %p188, %p189
      %p191 = scmp.ne.s32.totalorder %s180, %s183
      %p192 = scmp.eq.s32.totalorder %s23, 1
      %p193 = por %p191, %p192
      %p194 = scmp.ne.s32.totalorder %s183, %s184
      %p195 = scmp.eq.s32.totalorder %s23, 0
      %p196 = por %p194, %p195
      %p197 = scmp.ne.s32.totalorder %s183, %s184
      %p198 = scmp.eq.s32.totalorder %s24, 1
      %p199 = por %p197, %p198
      %p201 = scmp.ne.s32.totalorder %s184, %s200
      %p202 = scmp.eq.s32.totalorder %s24, 0
      %p203 = por %p201, %p202
      %p204 = scmp.le.s32.totalorder 1, %s18
      %p205 = scmp.lt.s32.totalorder %s18, 3
      %p206 = pnand %p204, %p205
      %p207 = pneg %p206
      // Predicated region
      $region9: #{tpu_custom_call.1} parent=5 // pred_check
        _
      $region10: #{tpu_custom_call.1} parent=5 // pred_check_branch
        %209 = sbr.rel (%p206) target = $region12
      $region11: #{tpu_custom_call.1} parent=5 // pred_region
        %s210 = ssub.s32 %s18, 1
        // Predicated region
        $region13: #{tpu_custom_call.1} parent=11 // pred_check
          %p211 = pneg %p65
        $region14: #{tpu_custom_call.1} parent=11 // pred_check_branch
          %213 = sbr.rel (%p211) target = $region16
        $region15: #{tpu_custom_call.1} parent=11 // pred_region
          _
        $region16: #{tpu_custom_call.1} parent=11 // pred_fallthru
          _
        // Predicated region
        $region17: #{tpu_custom_call.1} parent=11 // pred_check
          %p214 = pneg %p86
        $region18: #{tpu_custom_call.1} parent=11 // pred_check_branch
          %216 = sbr.rel (%p214) target = $region20
        $region19: #{tpu_custom_call.1} parent=11 // pred_region
          _
        $region20: #{tpu_custom_call.1} parent=11 // pred_fallthru
          _
        // Predicated region
        $region21: #{tpu_custom_call.1} parent=11 // pred_check
          %p217 = pneg %p107
        $region22: #{tpu_custom_call.1} parent=11 // pred_check_branch
          %219 = sbr.rel (%p217) target = $region24
        $region23: #{tpu_custom_call.1} parent=11 // pred_region
          _
        $region24: #{tpu_custom_call.1} parent=11 // pred_fallthru
          _
        // Predicated region
        $region25: #{tpu_custom_call.1} parent=11 // pred_check
          %p220 = pneg %p128
        $region26: #{tpu_custom_call.1} parent=11 // pred_check_branch
          %222 = sbr.rel (%p220) target = $region28
        $region27: #{tpu_custom_call.1} parent=11 // pred_region
          _
        $region28: #{tpu_custom_call.1} parent=11 // pred_fallthru
          _
        // Predicated region
        $region29: #{tpu_custom_call.1} parent=11 // pred_check
          %p223 = pneg %p149
        $region30: #{tpu_custom_call.1} parent=11 // pred_check_branch
          %225 = sbr.rel (%p223) target = $region32
        $region31: #{tpu_custom_call.1} parent=11 // pred_region
          _
        $region32: #{tpu_custom_call.1} parent=11 // pred_fallthru
          _
        // Predicated region
        $region33: #{tpu_custom_call.1} parent=11 // pred_check
          %p226 = pneg %p170
        $region34: #{tpu_custom_call.1} parent=11 // pred_check_branch
          %228 = sbr.rel (%p226) target = $region36
        $region35: #{tpu_custom_call.1} parent=11 // pred_region
          _
        $region36: #{tpu_custom_call.1} parent=11 // pred_fallthru
          _
      $region12: #{tpu_custom_call.1} parent=5 // pred_fallthru
        _
      %p229 = scmp.lt.s32.totalorder %s18, 2
      // Predicated region
      $region37: #{tpu_custom_call.1} parent=5 // pred_check
        %p230 = pneg %p229
      $region38: #{tpu_custom_call.1} parent=5 // pred_check_branch
        %232 = sbr.rel (%p230) target = $region40
      $region39: #{tpu_custom_call.1} parent=5 // pred_region
        // Predicated region
        $region41: #{tpu_custom_call.1} parent=39 // pred_check
          %p233 = pneg %p38
        $region42: #{tpu_custom_call.1} parent=39 // pred_check_branch
          %235 = sbr.rel (%p233) target = $region44
        $region43: #{tpu_custom_call.1} parent=39 // pred_region
          %s236 = smul.u32 64, %s18
          %s237 = ssub.s32 125, %s236
          %p238 = scmp.lt.s32.totalorder %s237, 64
          %s239 = scalar_select %p238, %s237, 64
          %s240 = smul.u32 128, %s239
          %p241 = scmp.lt.s32.totalorder %s236, 124
          %s242 = scalar_select %p241, %s236, 124
          %s243 = smul.addr %s242, 8
          %s244 = scalar_lea.vmem %s0, %s243
          %s245 = smul.u32 64, %s18
          %s246 = ssub.s32 125, %s245
          %p247 = scmp.lt.s32.totalorder %s246, 64
          %s248 = scalar_select %p247, %s246, 64
          %s249 = smul.u32 128, %s248
        $region44: #{tpu_custom_call.1} parent=39 // pred_fallthru
          _
      $region40: #{tpu_custom_call.1} parent=5 // pred_fallthru
        _
      %p250 = scmp.le.s32.totalorder 1, %s18
      %p251 = scmp.lt.s32.totalorder %s18, 3
      %p252 = pnand %p250, %p251
      %p253 = pneg %p252
      // Predicated region
      $region45: #{tpu_custom_call.1} parent=5 // pred_check
        _
      $region46: #{tpu_custom_call.1} parent=5 // pred_check_branch
        %255 = sbr.rel (%p252) target = $region48
      $region47: #{tpu_custom_call.1} parent=5 // pred_region
        %s256 = ssub.s32 %s18, 1
        %s257 = smul.u32 64, %s23
        %s258 = ssub.s32 125, %s257
        %p259 = scmp.lt.s32.totalorder %s258, 64
        %s260 = scalar_select %p259, %s258, 64
        %s261 = smul.u32 128, %s260
        %p262 = scmp.lt.s32.totalorder %s257, 124
        %s263 = scalar_select %p262, %s257, 124
        %s264 = smul.addr %s263, 8
        %s265 = scalar_lea.vmem %s0, %s264
        %p266 = pneg %p44
        %p267 = pneg %p41
        %p268 = pneg %p65
        %p269 = pneg %p62
        %p270 = pneg %p86
        %p271 = pneg %p83
        %p272 = pneg %p107
        %p273 = pneg %p104
        %p274 = pneg %p128
        %p275 = pneg %p125
        %p276 = pneg %p149
        %p277 = pneg %p146
        %p278 = pneg %p170
        %p279 = pneg %p167
        %p280 = pneg %p196
        %p281 = pneg %p193
        %s282 = sand.u32 %s183, 1
        %s283 = scalar_lea.sflag [#allocation4], %s282
        %s284 = sand.u32 %s183, 1
        %s285 = smul.addr %s284, 4
        %s286 = scalar_lea.vmem [#allocation3], %s285
        %s287 = smul.u32 64, %s23
        %s288 = ssub.s32 125, %s287
        %p289 = scmp.lt.s32.totalorder %s288, 64
        %s290 = scalar_select %p289, %s288, 64
        %s291 = smul.u32 128, %s290
        %p292 = scmp.lt.s32.totalorder %s287, 124
        %s293 = scalar_select %p292, %s287, 124
        %s294 = smul.addr %s293, 8
        %s295 = scalar_lea.vmem %s0, %s294
        %s296 = smul.u32 64, %s23
        %s297 = ssub.s32 125, %s296
        %p298 = scmp.lt.s32.totalorder %s297, 64
        %s299 = scalar_select %p298, %s297, 64
        %s300 = smul.u32 128, %s299
        %s301 = smul.u32 4, %s23
        %v302 = vld [vmem:[%s295] sm:$0xff]
        %v303 = vld [vmem:[%s295 + $0x8] sm:$0xff]
        %v304 = vld [vmem:[%s295 + $0x10] sm:$0xff]
        %v305 = vld [vmem:[%s295 + $0x18] sm:$0xff]
        %v306 = vld [vmem:[%s295 + $0x20] sm:$0xff]
        %v307 = vld [vmem:[%s295 + $0x28] sm:$0xff]
        %v308 = vld [vmem:[%s295 + $0x30] sm:$0xff]
        %v309 = vld [vmem:[%s295 + $0x38] sm:$0xff]
        %v310 = vld [vmem:[%s295 + $0x40] sm:$0xff]
        %v311 = vld [vmem:[%s295 + $0x48] sm:$0xff]
        %v312 = vld [vmem:[%s295 + $0x50] sm:$0xff]
        %v313 = vld [vmem:[%s295 + $0x58] sm:$0xff]
        %v314 = vld [vmem:[%s295 + $0x60] sm:$0xff]
        %v315 = vld [vmem:[%s295 + $0x68] sm:$0xff]
        %v316 = vld [vmem:[%s295 + $0x70] sm:$0xff]
        %v317 = vld [vmem:[%s295 + $0x78] sm:$0xff]
        %v318 = vld [vmem:[%s295 + $0x80] sm:$0xff]
        %v319 = vld [vmem:[%s295 + $0x88] sm:$0xff]
        %v320 = vld [vmem:[%s295 + $0x90] sm:$0xff]
        %v321 = vld [vmem:[%s295 + $0x98] sm:$0xff]
        %v322 = vld [vmem:[%s295 + $0xa0] sm:$0xff]
        %v323 = vld [vmem:[%s295 + $0xa8] sm:$0xff]
        %v324 = vld [vmem:[%s295 + $0xb0] sm:$0xff]
        %v325 = vld [vmem:[%s295 + $0xb8] sm:$0xff]
        %v326 = vld [vmem:[%s295 + $0xc0] sm:$0xff]
        %v327 = vld [vmem:[%s295 + $0xc8] sm:$0xff]
        %v328 = vld [vmem:[%s295 + $0xd0] sm:$0xff]
        %v329 = vld [vmem:[%s295 + $0xd8] sm:$0xff]
        %v330 = vld [vmem:[%s295 + $0xe0] sm:$0xff]
        %v331 = vld [vmem:[%s295 + $0xe8] sm:$0xff]
        %v332 = vld [vmem:[%s295 + $0xf0] sm:$0xff]
        %v333 = vld [vmem:[%s295 + $0xf8] sm:$0xff]
        %v334 = vld [vmem:[%s295 + $0x100] sm:$0xff]
        %v335 = vld [vmem:[%s295 + $0x108] sm:$0xff]
        %v336 = vld [vmem:[%s295 + $0x110] sm:$0xff]
        %v337 = vld [vmem:[%s295 + $0x118] sm:$0xff]
        %v338 = vld [vmem:[%s295 + $0x120] sm:$0xff]
        %v339 = vld [vmem:[%s295 + $0x128] sm:$0xff]
        %v340 = vld [vmem:[%s295 + $0x130] sm:$0xff]
        %v341 = vld [vmem:[%s295 + $0x138] sm:$0xff]
        %v342 = vld [vmem:[%s295 + $0x140] sm:$0xff]
        %v343 = vld [vmem:[%s295 + $0x148] sm:$0xff]
        %v344 = vld [vmem:[%s295 + $0x150] sm:$0xff]
        %v345 = vld [vmem:[%s295 + $0x158] sm:$0xff]
        %v346 = vld [vmem:[%s295 + $0x160] sm:$0xff]
        %v347 = vld [vmem:[%s295 + $0x168] sm:$0xff]
        %v348 = vld [vmem:[%s295 + $0x170] sm:$0xff]
        %v349 = vld [vmem:[%s295 + $0x178] sm:$0xff]
        %v350 = vld [vmem:[%s295 + $0x180] sm:$0xff]
        %v351 = vld [vmem:[%s295 + $0x188] sm:$0xff]
        %v352 = vld [vmem:[%s295 + $0x190] sm:$0xff]
        %v353 = vld [vmem:[%s295 + $0x198] sm:$0xff]
        %v354 = vld [vmem:[%s295 + $0x1a0] sm:$0xff]
        %v355 = vld [vmem:[%s295 + $0x1a8] sm:$0xff]
        %v356 = vld [vmem:[%s295 + $0x1b0] sm:$0xff]
        %v357 = vld [vmem:[%s295 + $0x1b8] sm:$0xff]
        %v358 = vld [vmem:[%s295 + $0x1c0] sm:$0xff]
        %v359 = vld [vmem:[%s295 + $0x1c8] sm:$0xff]
        %v360 = vld [vmem:[%s295 + $0x1d0] sm:$0xff]
        %v361 = vld [vmem:[%s295 + $0x1d8] sm:$0xff]
        %v362 = vld [vmem:[%s295 + $0x1e0] sm:$0xff]
        %v363 = vld [vmem:[%s295 + $0x1e8] sm:$0xff]
        %v364 = vld [vmem:[%s295 + $0x1f0] sm:$0xff]
        %v365 = vld [vmem:[%s295 + $0x1f8] sm:$0xff]
        %v366 = vld [vmem:[%s1] sm:$0xff]
        %v367 = vld [vmem:[%s1 + $0x8] sm:$0xff]
        %v368 = vld [vmem:[%s1 + $0x10] sm:$0xff]
        %v369 = vld [vmem:[%s1 + $0x18] sm:$0x3f]
        %v370 = vld [vmem:[%s2] sm:$0xff]
        %v371 = vld [vmem:[%s2 + $0x8] sm:$0xff]
        %v372 = vld [vmem:[%s2 + $0x10] sm:$0xff]
        %v373 = vld [vmem:[%s2 + $0x18] sm:$0x3f]
        %375 = vset.pattern.permute.xlu0 0
        %376 = vperm.xlu0 %375, %v370
        %v377 = vpop.permute.xlu0 %376
        %380 = vset.pattern.permute.xlu0 0
        %381 = vperm.xlu0 %380, %v371
        %v382 = vpop.permute.xlu0 %381
        %385 = vset.pattern.permute.xlu0 0
        %386 = vperm.xlu0 %385, %v372
        %v387 = vpop.permute.xlu0 %386
        %390 = vset.pattern.permute.xlu0 0
        %391 = vperm.xlu0 %390, %v373
        %v392 = vpop.permute.xlu0 %391
        %vm394 = vcmask 130048
        %v396 = vsel %vm394, %v366, 0
        %v399 = vsel %vm394, %v367, 0
        %v402 = vsel %vm394, %v368, 0
        %v405 = vsel %vm394, %v369, 0
        %v408 = vsel %vm394, %v302, 0
        %v411 = vsel %vm394, %v303, 0
        %v414 = vsel %vm394, %v304, 0
        %v417 = vsel %vm394, %v305, 0
        %v420 = vsel %vm394, %v306, 0
        %v423 = vsel %vm394, %v307, 0
        %v426 = vsel %vm394, %v308, 0
        %v429 = vsel %vm394, %v309, 0
        %v432 = vsel %vm394, %v310, 0
        %v435 = vsel %vm394, %v311, 0
        %v438 = vsel %vm394, %v312, 0
        %v441 = vsel %vm394, %v313, 0
        %v444 = vsel %vm394, %v314, 0
        %v447 = vsel %vm394, %v315, 0
        %v450 = vsel %vm394, %v316, 0
        %v453 = vsel %vm394, %v317, 0
        %v456 = vsel %vm394, %v318, 0
        %v459 = vsel %vm394, %v319, 0
        %v462 = vsel %vm394, %v320, 0
        %v465 = vsel %vm394, %v321, 0
        %v468 = vsel %vm394, %v322, 0
        %v471 = vsel %vm394, %v323, 0
        %v474 = vsel %vm394, %v324, 0
        %v477 = vsel %vm394, %v325, 0
        %v480 = vsel %vm394, %v326, 0
        %v483 = vsel %vm394, %v327, 0
        %v486 = vsel %vm394, %v328, 0
        %v489 = vsel %vm394, %v329, 0
        %v492 = vsel %vm394, %v330, 0
        %v495 = vsel %vm394, %v331, 0
        %v498 = vsel %vm394, %v332, 0
        %v501 = vsel %vm394, %v333, 0
        %v504 = vsel %vm394, %v334, 0
        %v507 = vsel %vm394, %v335, 0
        %v510 = vsel %vm394, %v336, 0
        %v513 = vsel %vm394, %v337, 0
        %v516 = vsel %vm394, %v338, 0
        %v519 = vsel %vm394, %v339, 0
        %v522 = vsel %vm394, %v340, 0
        %v525 = vsel %vm394, %v341, 0
        %v528 = vsel %vm394, %v342, 0
        %v531 = vsel %vm394, %v343, 0
        %v534 = vsel %vm394, %v344, 0
        %v537 = vsel %vm394, %v345, 0
        %v540 = vsel %vm394, %v346, 0
        %v543 = vsel %vm394, %v347, 0
        %v546 = vsel %vm394, %v348, 0
        %v549 = vsel %vm394, %v349, 0
        %v552 = vsel %vm394, %v350, 0
        %v555 = vsel %vm394, %v351, 0
        %v558 = vsel %vm394, %v352, 0
        %v561 = vsel %vm394, %v353, 0
        %v564 = vsel %vm394, %v354, 0
        %v567 = vsel %vm394, %v355, 0
        %v570 = vsel %vm394, %v356, 0
        %v573 = vsel %vm394, %v357, 0
        %v576 = vsel %vm394, %v358, 0
        %v579 = vsel %vm394, %v359, 0
        %v582 = vsel %vm394, %v360, 0
        %v585 = vsel %vm394, %v361, 0
        %v588 = vsel %vm394, %v362, 0
        %v591 = vsel %vm394, %v363, 0
        %v594 = vsel %vm394, %v364, 0
        %v597 = vsel %vm394, %v365, 0
        %599 = vmatprep.subr.mxu0 0.0
        %600 = vmatpush1.xpose.msra.mxu0 %v453
        %601 = vmatprep.subr.mxu0 0.0
        %602 = vmatpush1.xpose.msra.mxu0 %v450
        %603 = vmatprep.subr.mxu0 0.0
        %604 = vmatpush1.xpose.msra.mxu0 %v447
        %605 = vmatprep.subr.mxu0 0.0
        %606 = vmatpush1.xpose.msra.mxu0 %v444
        %607 = vmatprep.subr.mxu0 0.0
        %608 = vmatpush1.xpose.msra.mxu0 %v441
        %609 = vmatprep.subr.mxu0 0.0
        %610 = vmatpush1.xpose.msra.mxu0 %v438
        %611 = vmatprep.subr.mxu0 0.0
        %612 = vmatpush1.xpose.msra.mxu0 %v435
        %613 = vmatprep.subr.mxu0 0.0
        %614 = vmatpush1.xpose.msra.mxu0 %v432
        %615 = vmatprep.subr.mxu0 0.0
        %616 = vmatpush1.xpose.msra.mxu0 %v429
        %617 = vmatprep.subr.mxu0 0.0
        %618 = vmatpush1.xpose.msra.mxu0 %v426
        %619 = vmatprep.subr.mxu0 0.0
        %620 = vmatpush1.xpose.msra.mxu0 %v423
        %621 = vmatprep.subr.mxu0 0.0
        %622 = vmatpush1.xpose.msra.mxu0 %v420
        %623 = vmatprep.subr.mxu0 0.0
        %624 = vmatpush1.xpose.msra.mxu0 %v417
        %625 = vmatprep.subr.mxu0 0.0
        %626 = vmatpush1.xpose.msra.mxu0 %v414
        %627 = vmatprep.subr.mxu0 0.0
        %628 = vmatpush1.xpose.msra.mxu0 %v411
        %629 = vmatprep.subr.mxu0 0.0
        %630 = vmatpush1.xpose.msra.mxu0 %v408
        %631 = vmatprep.subr.mxu0 0.0
        %632 = vmatpush2.xpose.msra.mxu0 %v501
        %633 = vmatprep.subr.mxu0 0.0
        %634 = vmatpush2.xpose.msra.mxu0 %v498
        %635 = vmatprep.subr.mxu0 0.0
        %636 = vmatpush2.xpose.msra.mxu0 %v495
        %637 = vmatprep.subr.mxu0 0.0
        %638 = vmatpush2.xpose.msra.mxu0 %v492
        %639 = vmatprep.subr.mxu0 0.0
        %640 = vmatpush2.xpose.msra.mxu0 %v489
        %641 = vmatprep.subr.mxu0 0.0
        %642 = vmatpush2.xpose.msra.mxu0 %v486
        %643 = vmatprep.subr.mxu0 0.0
        %644 = vmatpush2.xpose.msra.mxu0 %v483
        %645 = vmatprep.subr.mxu0 0.0
        %646 = vmatpush2.xpose.msra.mxu0 %v480
        %647 = vmatprep.subr.mxu0 0.0
        %648 = vmatpush2.xpose.msra.mxu0 %v477
        %649 = vmatprep.subr.mxu0 0.0
        %650 = vmatpush2.xpose.msra.mxu0 %v474
        %651 = vmatprep.subr.mxu0 0.0
        %652 = vmatpush2.xpose.msra.mxu0 %v471
        %653 = vmatprep.subr.mxu0 0.0
        %654 = vmatpush2.xpose.msra.mxu0 %v468
        %655 = vmatprep.subr.mxu0 0.0
        %656 = vmatpush2.xpose.msra.mxu0 %v465
        %657 = vmatprep.subr.mxu0 0.0
        %658 = vmatpush2.xpose.msra.mxu0 %v462
        %659 = vmatprep.subr.mxu0 0.0
        %660 = vmatpush2.xpose.msra.mxu0 %v459
        %661 = vmatprep.subr.mxu0 0.0
        %662 = vmatpush2.xpose.msra.mxu0 %v456
        %663 = vmatprep.mubr.f32.mxu0 0.0
        %664 = vmatmul.mubr.f32.gmra.mxu0 %v396
        %v665 = vpop.f32.mrf.mxu0
        %v666 = vadd.f32 %v377, %v665
        %v667 = vpop.f32.mrf.mxu0
        %v668 = vadd.f32 %v377, %v667
        %669 = vmatprep.mubr.f32.mxu0 0.0
        %670 = vmatmul.mubr.f32.gmra.mxu0 %v399
        %v671 = vpop.f32.mrf.mxu0
        %v672 = vadd.f32 %v382, %v671
        %v673 = vpop.f32.mrf.mxu0
        %v674 = vadd.f32 %v382, %v673
        %675 = vmatprep.mubr.f32.mxu0 0.0
        %676 = vmatmul.mubr.f32.gmra.mxu0 %v402
        %v677 = vpop.f32.mrf.mxu0
        %v678 = vadd.f32 %v387, %v677
        %v679 = vpop.f32.mrf.mxu0
        %v680 = vadd.f32 %v387, %v679
        %681 = vmatprep.mubr.f32.mxu0 0.0
        %682 = vmatmul.mubr.f32.gmra.mxu0 %v405
        %v683 = vpop.f32.mrf.mxu0
        %v684 = vadd.f32 %v392, %v683
        %v685 = vpop.f32.mrf.mxu0
        %v686 = vadd.f32 %v392, %v685
        %687 = vdwg.mxu0
        %688 = vmatprep.subr.mxu0 0.0
        %689 = vmatpush1.xpose.msra.mxu0 %v549
        %690 = vmatprep.subr.mxu0 0.0
        %691 = vmatpush1.xpose.msra.mxu0 %v546
        %692 = vmatprep.subr.mxu0 0.0
        %693 = vmatpush1.xpose.msra.mxu0 %v543
        %694 = vmatprep.subr.mxu0 0.0
        %695 = vmatpush1.xpose.msra.mxu0 %v540
        %696 = vmatprep.subr.mxu0 0.0
        %697 = vmatpush1.xpose.msra.mxu0 %v537
        %698 = vmatprep.subr.mxu0 0.0
        %699 = vmatpush1.xpose.msra.mxu0 %v534
        %700 = vmatprep.subr.mxu0 0.0
        %701 = vmatpush1.xpose.msra.mxu0 %v531
        %702 = vmatprep.subr.mxu0 0.0
        %703 = vmatpush1.xpose.msra.mxu0 %v528
        %704 = vmatprep.subr.mxu0 0.0
        %705 = vmatpush1.xpose.msra.mxu0 %v525
        %706 = vmatprep.subr.mxu0 0.0
        %707 = vmatpush1.xpose.msra.mxu0 %v522
        %708 = vmatprep.subr.mxu0 0.0
        %709 = vmatpush1.xpose.msra.mxu0 %v519
        %710 = vmatprep.subr.mxu0 0.0
        %711 = vmatpush1.xpose.msra.mxu0 %v516
        %712 = vmatprep.subr.mxu0 0.0
        %713 = vmatpush1.xpose.msra.mxu0 %v513
        %714 = vmatprep.subr.mxu0 0.0
        %715 = vmatpush1.xpose.msra.mxu0 %v510
        %716 = vmatprep.subr.mxu0 0.0
        %717 = vmatpush1.xpose.msra.mxu0 %v507
        %718 = vmatprep.subr.mxu0 0.0
        %719 = vmatpush1.xpose.msra.mxu0 %v504
        %720 = vmatprep.subr.mxu0 0.0
        %721 = vmatpush2.xpose.msra.mxu0 %v597
        %722 = vmatprep.subr.mxu0 0.0
        %723 = vmatpush2.xpose.msra.mxu0 %v594
        %724 = vmatprep.subr.mxu0 0.0
        %725 = vmatpush2.xpose.msra.mxu0 %v591
        %726 = vmatprep.subr.mxu0 0.0
        %727 = vmatpush2.xpose.msra.mxu0 %v588
        %728 = vmatprep.subr.mxu0 0.0
        %729 = vmatpush2.xpose.msra.mxu0 %v585
        %730 = vmatprep.subr.mxu0 0.0
        %731 = vmatpush2.xpose.msra.mxu0 %v582
        %732 = vmatprep.subr.mxu0 0.0
        %733 = vmatpush2.xpose.msra.mxu0 %v579
        %734 = vmatprep.subr.mxu0 0.0
        %735 = vmatpush2.xpose.msra.mxu0 %v576
        %736 = vmatprep.subr.mxu0 0.0
        %737 = vmatpush2.xpose.msra.mxu0 %v573
        %738 = vmatprep.subr.mxu0 0.0
        %739 = vmatpush2.xpose.msra.mxu0 %v570
        %740 = vmatprep.subr.mxu0 0.0
        %741 = vmatpush2.xpose.msra.mxu0 %v567
        %742 = vmatprep.subr.mxu0 0.0
        %743 = vmatpush2.xpose.msra.mxu0 %v564
        %744 = vmatprep.subr.mxu0 0.0
        %745 = vmatpush2.xpose.msra.mxu0 %v561
        %746 = vmatprep.subr.mxu0 0.0
        %747 = vmatpush2.xpose.msra.mxu0 %v558
        %748 = vmatprep.subr.mxu0 0.0
        %749 = vmatpush2.xpose.msra.mxu0 %v555
        %750 = vmatprep.subr.mxu0 0.0
        %751 = vmatpush2.xpose.msra.mxu0 %v552
        %752 = vmatprep.mubr.f32.mxu0 0.0
        %753 = vmatmul.mubr.f32.gmra.mxu0 %v396
        %v754 = vpop.f32.mrf.mxu0
        %v755 = vadd.f32 %v377, %v754
        %v756 = vpop.f32.mrf.mxu0
        %v757 = vadd.f32 %v377, %v756
        %758 = vmatprep.mubr.f32.mxu0 0.0
        %759 = vmatmul.mubr.f32.gmra.mxu0 %v399
        %v760 = vpop.f32.mrf.mxu0
        %v761 = vadd.f32 %v382, %v760
        %v762 = vpop.f32.mrf.mxu0
        %v763 = vadd.f32 %v382, %v762
        %764 = vmatprep.mubr.f32.mxu0 0.0
        %765 = vmatmul.mubr.f32.gmra.mxu0 %v402
        %v766 = vpop.f32.mrf.mxu0
        %v767 = vadd.f32 %v387, %v766
        %v768 = vpop.f32.mrf.mxu0
        %v769 = vadd.f32 %v387, %v768
        %770 = vmatprep.mubr.f32.mxu0 0.0
        %771 = vmatmul.mubr.f32.gmra.mxu0 %v405
        %v772 = vpop.f32.mrf.mxu0
        %v773 = vadd.f32 %v392, %v772
        %v774 = vpop.f32.mrf.mxu0
        %v775 = vadd.f32 %v392, %v774
        %776 = vdwg.mxu0
        %v777 = vmax.f32 %v666, 0.0
        %v778 = vmax.f32 %v668, 0.0
        %v779 = vmax.f32 %v755, 0.0
        %v780 = vmax.f32 %v757, 0.0
        %v781 = vmax.f32 %v672, 0.0
        %v782 = vmax.f32 %v674, 0.0
        %v783 = vmax.f32 %v761, 0.0
        %v784 = vmax.f32 %v763, 0.0
        %v785 = vmax.f32 %v678, 0.0
        %v786 = vmax.f32 %v680, 0.0
        %v787 = vmax.f32 %v767, 0.0
        %v788 = vmax.f32 %v769, 0.0
        %v789 = vmax.f32 %v684, 0.0
        %v790 = vmax.f32 %v686, 0.0
        %v791 = vmax.f32 %v773, 0.0
        %v792 = vmax.f32 %v775, 0.0
        %v793 = vld [vmem:[%s3] sm:$0xff]
        %v794 = vld [vmem:[%s3 + $0x8] sm:$0x3]
        %v795 = vld [vmem:[%s4] sm:$0xff]
        %v796 = vld [vmem:[%s4 + $0x8] sm:$0x3]
        %798 = vset.pattern.permute.xlu0 0
        %799 = vperm.xlu0 %798, %v795
        %v800 = vpop.permute.xlu0 %799
        %803 = vset.pattern.permute.xlu0 0
        %804 = vperm.xlu0 %803, %v796
        %v805 = vpop.permute.xlu0 %804
        %vm807 = vcmask 244736
        %v809 = vsel %vm807, %v793, 0
        %v812 = vsel %vm807, %v794, 0
        %vm814 = vcmask 1045504
        %v816 = vsel %vm814, %v789, 0
        %v819 = vsel %vm814, %v790, 0
        %v822 = vsel %vm814, %v791, 0
        %v825 = vsel %vm814, %v792, 0
        %827 = vmatprep.subr.mxu0 0.0
        %828 = vmatpush1.msra.mxu0 0.0
        %829 = vmatprep.subr.mxu0 0.0
        %830 = vmatpush1.msra.mxu0 0.0
        %831 = vmatprep.subr.mxu0 0.0
        %832 = vmatpush1.msra.mxu0 0.0
        %833 = vmatprep.subr.mxu0 0.0
        %834 = vmatpush1.msra.mxu0 0.0
        %835 = vmatprep.subr.mxu0 0.0
        %836 = vmatpush1.msra.mxu0 0.0
        %837 = vmatprep.subr.mxu0 0.0
        %838 = vmatpush1.msra.mxu0 0.0
        %839 = vmatprep.subr.mxu0 0.0
        %840 = vmatpush1.msra.mxu0 0.0
        %841 = vmatprep.subr.mxu0 0.0
        %842 = vmatpush1.msra.mxu0 0.0
        %843 = vmatprep.subr.mxu0 0.0
        %844 = vmatpush1.msra.mxu0 0.0
        %845 = vmatprep.subr.mxu0 0.0
        %846 = vmatpush1.msra.mxu0 0.0
        %847 = vmatprep.subr.mxu0 0.0
        %848 = vmatpush1.msra.mxu0 0.0
        %849 = vmatprep.subr.mxu0 0.0
        %850 = vmatpush1.msra.mxu0 0.0
        %851 = vmatprep.subr.mxu0 %v819
        %852 = vmatpush1.msra.mxu0 %v816
        %853 = vmatprep.subr.mxu0 %v786
        %854 = vmatpush1.msra.mxu0 %v785
        %855 = vmatprep.subr.mxu0 %v782
        %856 = vmatpush1.msra.mxu0 %v781
        %857 = vmatprep.subr.mxu0 %v778
        %858 = vmatpush1.msra.mxu0 %v777
        %859 = vmatprep.subr.mxu0 0.0
        %860 = vmatpush2.msra.mxu0 0.0
        %861 = vmatprep.subr.mxu0 0.0
        %862 = vmatpush2.msra.mxu0 0.0
        %863 = vmatprep.subr.mxu0 0.0
        %864 = vmatpush2.msra.mxu0 0.0
        %865 = vmatprep.subr.mxu0 0.0
        %866 = vmatpush2.msra.mxu0 0.0
        %867 = vmatprep.subr.mxu0 0.0
        %868 = vmatpush2.msra.mxu0 0.0
        %869 = vmatprep.subr.mxu0 0.0
        %870 = vmatpush2.msra.mxu0 0.0
        %871 = vmatprep.subr.mxu0 0.0
        %872 = vmatpush2.msra.mxu0 0.0
        %873 = vmatprep.subr.mxu0 0.0
        %874 = vmatpush2.msra.mxu0 0.0
        %875 = vmatprep.subr.mxu0 0.0
        %876 = vmatpush2.msra.mxu0 0.0
        %877 = vmatprep.subr.mxu0 0.0
        %878 = vmatpush2.msra.mxu0 0.0
        %879 = vmatprep.subr.mxu0 0.0
        %880 = vmatpush2.msra.mxu0 0.0
        %881 = vmatprep.subr.mxu0 0.0
        %882 = vmatpush2.msra.mxu0 0.0
        %883 = vmatprep.subr.mxu0 0.0
        %884 = vmatpush2.msra.mxu0 0.0
        %885 = vmatprep.subr.mxu0 0.0
        %886 = vmatpush2.msra.mxu0 0.0
        %887 = vmatprep.subr.mxu0 0.0
        %888 = vmatpush2.msra.mxu0 0.0
        %889 = vmatprep.subr.mxu0 0.0
        %890 = vmatpush2.msra.mxu0 0.0
        %891 = vmatprep.mubr.f32.mxu0 0.0
        %892 = vmatmul.mubr.f32.gmra.mxu0 %v809
        %v893 = vpop.f32.mrf.mxu0
        %v894 = vadd.f32 %v800, %v893
        %v895 = vpop.f32.mrf.mxu0
        %v896 = vadd.f32 %v800, %v895
        %897 = vmatprep.mubr.f32.mxu0 0.0
        %898 = vmatmul.mubr.f32.gmra.mxu0 %v812
        %v899 = vpop.f32.mrf.mxu0
        %v900 = vadd.f32 %v805, %v899
        %v901 = vpop.f32.mrf.mxu0
        %v902 = vadd.f32 %v805, %v901
        %903 = vdwg.mxu0
        %904 = vmatprep.subr.mxu0 0.0
        %905 = vmatpush1.msra.mxu0 0.0
        %906 = vmatprep.subr.mxu0 0.0
        %907 = vmatpush1.msra.mxu0 0.0
        %908 = vmatprep.subr.mxu0 0.0
        %909 = vmatpush1.msra.mxu0 0.0
        %910 = vmatprep.subr.mxu0 0.0
        %911 = vmatpush1.msra.mxu0 0.0
        %912 = vmatprep.subr.mxu0 0.0
        %913 = vmatpush1.msra.mxu0 0.0
        %914 = vmatprep.subr.mxu0 0.0
        %915 = vmatpush1.msra.mxu0 0.0
        %916 = vmatprep.subr.mxu0 0.0
        %917 = vmatpush1.msra.mxu0 0.0
        %918 = vmatprep.subr.mxu0 0.0
        %919 = vmatpush1.msra.mxu0 0.0
        %920 = vmatprep.subr.mxu0 0.0
        %921 = vmatpush1.msra.mxu0 0.0
        %922 = vmatprep.subr.mxu0 0.0
        %923 = vmatpush1.msra.mxu0 0.0
        %924 = vmatprep.subr.mxu0 0.0
        %925 = vmatpush1.msra.mxu0 0.0
        %926 = vmatprep.subr.mxu0 0.0
        %927 = vmatpush1.msra.mxu0 0.0
        %928 = vmatprep.subr.mxu0 %v825
        %929 = vmatpush1.msra.mxu0 %v822
        %930 = vmatprep.subr.mxu0 %v788
        %931 = vmatpush1.msra.mxu0 %v787
        %932 = vmatprep.subr.mxu0 %v784
        %933 = vmatpush1.msra.mxu0 %v783
        %934 = vmatprep.subr.mxu0 %v780
        %935 = vmatpush1.msra.mxu0 %v779
        %936 = vmatprep.subr.mxu0 0.0
        %937 = vmatpush2.msra.mxu0 0.0
        %938 = vmatprep.subr.mxu0 0.0
        %939 = vmatpush2.msra.mxu0 0.0
        %940 = vmatprep.subr.mxu0 0.0
        %941 = vmatpush2.msra.mxu0 0.0
        %942 = vmatprep.subr.mxu0 0.0
        %943 = vmatpush2.msra.mxu0 0.0
        %944 = vmatprep.subr.mxu0 0.0
        %945 = vmatpush2.msra.mxu0 0.0
        %946 = vmatprep.subr.mxu0 0.0
        %947 = vmatpush2.msra.mxu0 0.0
        %948 = vmatprep.subr.mxu0 0.0
        %949 = vmatpush2.msra.mxu0 0.0
        %950 = vmatprep.subr.mxu0 0.0
        %951 = vmatpush2.msra.mxu0 0.0
        %952 = vmatprep.subr.mxu0 0.0
        %953 = vmatpush2.msra.mxu0 0.0
        %954 = vmatprep.subr.mxu0 0.0
        %955 = vmatpush2.msra.mxu0 0.0
        %956 = vmatprep.subr.mxu0 0.0
        %957 = vmatpush2.msra.mxu0 0.0
        %958 = vmatprep.subr.mxu0 0.0
        %959 = vmatpush2.msra.mxu0 0.0
        %960 = vmatprep.subr.mxu0 0.0
        %961 = vmatpush2.msra.mxu0 0.0
        %962 = vmatprep.subr.mxu0 0.0
        %963 = vmatpush2.msra.mxu0 0.0
        %964 = vmatprep.subr.mxu0 0.0
        %965 = vmatpush2.msra.mxu0 0.0
        %966 = vmatprep.subr.mxu0 0.0
        %967 = vmatpush2.msra.mxu0 0.0
        %968 = vmatprep.mubr.f32.mxu0 0.0
        %969 = vmatmul.mubr.f32.gmra.mxu0 %v809
        %v970 = vpop.f32.mrf.mxu0
        %v971 = vadd.f32 %v800, %v970
        %v972 = vpop.f32.mrf.mxu0
        %v973 = vadd.f32 %v800, %v972
        %974 = vmatprep.mubr.f32.mxu0 0.0
        %975 = vmatmul.mubr.f32.gmra.mxu0 %v812
        %v976 = vpop.f32.mrf.mxu0
        %v977 = vadd.f32 %v805, %v976
        %v978 = vpop.f32.mrf.mxu0
        %v979 = vadd.f32 %v805, %v978
        %980 = vdwg.mxu0
        %v981 = vmax.f32 %v894, 0.0
        %v982 = vmax.f32 %v896, 0.0
        %v983 = vmax.f32 %v971, 0.0
        %v984 = vmax.f32 %v973, 0.0
        %v985 = vmax.f32 %v900, 0.0
        %v986 = vmax.f32 %v902, 0.0
        %v987 = vmax.f32 %v977, 0.0
        %v988 = vmax.f32 %v979, 0.0
        %v989 = vld [vmem:[%s5] sm:$0x1]
        %v990 = vld [vmem:[#allocation2] sm:$0x1]
        %992 = vset.pattern.permute.xlu0 0
        %993 = vperm.xlu0 %992, %v990
        %v994 = vpop.permute.xlu0 %993
        %v996 = vlaneseq
        %v997 = vshrl.u32 %v996, 7
        %v998 = vsub.s32 0, %v997
        %v999 = vrot.slane %v994, %v998
        %vm1000 = vcmask 80896
        %v1002 = vsel %vm1000, %v989, 0
        %vm1004 = vcmask 1041408
        %v1006 = vsel %vm1004, %v985, 0
        %v1009 = vsel %vm1004, %v986, 0
        %v1012 = vsel %vm1004, %v987, 0
        %v1015 = vsel %vm1004, %v988, 0
        %1017 = vmatprep.subr.mxu0 0.0
        %1018 = vmatpush1.msra.mxu0 0.0
        %1019 = vmatprep.subr.mxu0 0.0
        %1020 = vmatpush1.msra.mxu0 0.0
        %1021 = vmatprep.subr.mxu0 0.0
        %1022 = vmatpush1.msra.mxu0 0.0
        %1023 = vmatprep.subr.mxu0 0.0
        %1024 = vmatpush1.msra.mxu0 0.0
        %1025 = vmatprep.subr.mxu0 0.0
        %1026 = vmatpush1.msra.mxu0 0.0
        %1027 = vmatprep.subr.mxu0 0.0
        %1028 = vmatpush1.msra.mxu0 0.0
        %1029 = vmatprep.subr.mxu0 0.0
        %1030 = vmatpush1.msra.mxu0 0.0
        %1031 = vmatprep.subr.mxu0 0.0
        %1032 = vmatpush1.msra.mxu0 0.0
        %1033 = vmatprep.subr.mxu0 0.0
        %1034 = vmatpush1.msra.mxu0 0.0
        %1035 = vmatprep.subr.mxu0 0.0
        %1036 = vmatpush1.msra.mxu0 0.0
        %1037 = vmatprep.subr.mxu0 0.0
        %1038 = vmatpush1.msra.mxu0 0.0
        %1039 = vmatprep.subr.mxu0 0.0
        %1040 = vmatpush1.msra.mxu0 0.0
        %1041 = vmatprep.subr.mxu0 0.0
        %1042 = vmatpush1.msra.mxu0 0.0
        %1043 = vmatprep.subr.mxu0 0.0
        %1044 = vmatpush1.msra.mxu0 0.0
        %1045 = vmatprep.subr.mxu0 %v1009
        %1046 = vmatpush1.msra.mxu0 %v1006
        %1047 = vmatprep.subr.mxu0 %v982
        %1048 = vmatpush1.msra.mxu0 %v981
        %1049 = vmatprep.subr.mxu0 0.0
        %1050 = vmatpush2.msra.mxu0 0.0
        %1051 = vmatprep.subr.mxu0 0.0
        %1052 = vmatpush2.msra.mxu0 0.0
        %1053 = vmatprep.subr.mxu0 0.0
        %1054 = vmatpush2.msra.mxu0 0.0
        %1055 = vmatprep.subr.mxu0 0.0
        %1056 = vmatpush2.msra.mxu0 0.0
        %1057 = vmatprep.subr.mxu0 0.0
        %1058 = vmatpush2.msra.mxu0 0.0
        %1059 = vmatprep.subr.mxu0 0.0
        %1060 = vmatpush2.msra.mxu0 0.0
        %1061 = vmatprep.subr.mxu0 0.0
        %1062 = vmatpush2.msra.mxu0 0.0
        %1063 = vmatprep.subr.mxu0 0.0
        %1064 = vmatpush2.msra.mxu0 0.0
        %1065 = vmatprep.subr.mxu0 0.0
        %1066 = vmatpush2.msra.mxu0 0.0
        %1067 = vmatprep.subr.mxu0 0.0
        %1068 = vmatpush2.msra.mxu0 0.0
        %1069 = vmatprep.subr.mxu0 0.0
        %1070 = vmatpush2.msra.mxu0 0.0
        %1071 = vmatprep.subr.mxu0 0.0
        %1072 = vmatpush2.msra.mxu0 0.0
        %1073 = vmatprep.subr.mxu0 0.0
        %1074 = vmatpush2.msra.mxu0 0.0
        %1075 = vmatprep.subr.mxu0 0.0
        %1076 = vmatpush2.msra.mxu0 0.0
        %1077 = vmatprep.subr.mxu0 0.0
        %1078 = vmatpush2.msra.mxu0 0.0
        %1079 = vmatprep.subr.mxu0 0.0
        %1080 = vmatpush2.msra.mxu0 0.0
        %1081 = vmatprep.mubr.f32.mxu0 0.0
        %1082 = vmatmul.mubr.f32.gmra.mxu0 %v1002
        %v1083 = vpop.f32.mrf.mxu0
        %v1084 = vadd.f32 %v999, %v1083
        %v1085 = vpop.f32.mrf.mxu0
        %v1086 = vadd.f32 %v999, %v1085
        %1087 = vdwg.mxu0
        %1088 = vmatprep.subr.mxu0 0.0
        %1089 = vmatpush1.msra.mxu0 0.0
        %1090 = vmatprep.subr.mxu0 0.0
        %1091 = vmatpush1.msra.mxu0 0.0
        %1092 = vmatprep.subr.mxu0 0.0
        %1093 = vmatpush1.msra.mxu0 0.0
        %1094 = vmatprep.subr.mxu0 0.0
        %1095 = vmatpush1.msra.mxu0 0.0
        %1096 = vmatprep.subr.mxu0 0.0
        %1097 = vmatpush1.msra.mxu0 0.0
        %1098 = vmatprep.subr.mxu0 0.0
        %1099 = vmatpush1.msra.mxu0 0.0
        %1100 = vmatprep.subr.mxu0 0.0
        %1101 = vmatpush1.msra.mxu0 0.0
        %1102 = vmatprep.subr.mxu0 0.0
        %1103 = vmatpush1.msra.mxu0 0.0
        %1104 = vmatprep.subr.mxu0 0.0
        %1105 = vmatpush1.msra.mxu0 0.0
        %1106 = vmatprep.subr.mxu0 0.0
        %1107 = vmatpush1.msra.mxu0 0.0
        %1108 = vmatprep.subr.mxu0 0.0
        %1109 = vmatpush1.msra.mxu0 0.0
        %1110 = vmatprep.subr.mxu0 0.0
        %1111 = vmatpush1.msra.mxu0 0.0
        %1112 = vmatprep.subr.mxu0 0.0
        %1113 = vmatpush1.msra.mxu0 0.0
        %1114 = vmatprep.subr.mxu0 0.0
        %1115 = vmatpush1.msra.mxu0 0.0
        %1116 = vmatprep.subr.mxu0 %v1015
        %1117 = vmatpush1.msra.mxu0 %v1012
        %1118 = vmatprep.subr.mxu0 %v984
        %1119 = vmatpush1.msra.mxu0 %v983
        %1120 = vmatprep.subr.mxu0 0.0
        %1121 = vmatpush2.msra.mxu0 0.0
        %1122 = vmatprep.subr.mxu0 0.0
        %1123 = vmatpush2.msra.mxu0 0.0
        %1124 = vmatprep.subr.mxu0 0.0
        %1125 = vmatpush2.msra.mxu0 0.0
        %1126 = vmatprep.subr.mxu0 0.0
        %1127 = vmatpush2.msra.mxu0 0.0
        %1128 = vmatprep.subr.mxu0 0.0
        %1129 = vmatpush2.msra.mxu0 0.0
        %1130 = vmatprep.subr.mxu0 0.0
        %1131 = vmatpush2.msra.mxu0 0.0
        %1132 = vmatprep.subr.mxu0 0.0
        %1133 = vmatpush2.msra.mxu0 0.0
        %1134 = vmatprep.subr.mxu0 0.0
        %1135 = vmatpush2.msra.mxu0 0.0
        %1136 = vmatprep.subr.mxu0 0.0
        %1137 = vmatpush2.msra.mxu0 0.0
        %1138 = vmatprep.subr.mxu0 0.0
        %1139 = vmatpush2.msra.mxu0 0.0
        %1140 = vmatprep.subr.mxu0 0.0
        %1141 = vmatpush2.msra.mxu0 0.0
        %1142 = vmatprep.subr.mxu0 0.0
        %1143 = vmatpush2.msra.mxu0 0.0
        %1144 = vmatprep.subr.mxu0 0.0
        %1145 = vmatpush2.msra.mxu0 0.0
        %1146 = vmatprep.subr.mxu0 0.0
        %1147 = vmatpush2.msra.mxu0 0.0
        %1148 = vmatprep.subr.mxu0 0.0
        %1149 = vmatpush2.msra.mxu0 0.0
        %1150 = vmatprep.subr.mxu0 0.0
        %1151 = vmatpush2.msra.mxu0 0.0
        %1152 = vmatprep.mubr.f32.mxu0 0.0
        %1153 = vmatmul.mubr.f32.gmra.mxu0 %v1002
        %v1154 = vpop.f32.mrf.mxu0
        %v1155 = vadd.f32 %v999, %v1154
        %v1156 = vpop.f32.mrf.mxu0
        %v1157 = vadd.f32 %v999, %v1156
        %1158 = vdwg.mxu0
        %v1159 = vxor.u32 %v1084, 2147483648
        %v1160 = vxor.u32 %v1086, 2147483648
        %v1161 = vxor.u32 %v1155, 2147483648
        %v1162 = vxor.u32 %v1157, 2147483648
        %v1163 = vmul.f32 %v1159, 1.442695
        %v1164 = vpow.pop %v1163
        %v1165 = vmul.f32 %v1160, 1.442695
        %v1166 = vpow.pop %v1165
        %v1167 = vmul.f32 %v1161, 1.442695
        %v1168 = vpow.pop %v1167
        %v1169 = vmul.f32 %v1162, 1.442695
        %v1170 = vpow.pop %v1169
        %v1171 = vadd.f32 %v1164, 1.0
        %v1172 = vadd.f32 %v1166, 1.0
        %v1173 = vadd.f32 %v1168, 1.0
        %v1174 = vadd.f32 %v1170, 1.0
        %v1175 = vrcp.pop %v1171
        %v1176 = vmul.f32 1.0, %v1175
        %v1177 = vrcp.pop %v1172
        %v1178 = vmul.f32 1.0, %v1177
        %v1179 = vrcp.pop %v1173
        %v1180 = vmul.f32 1.0, %v1179
        %v1181 = vrcp.pop %v1174
        %v1182 = vmul.f32 1.0, %v1181
        %v1187 = vcombine.low %v1176, %v1178
        %v1188 = vcombine.low %v1180, %v1182
        %v1190 = vunpack.c.l.s4 1966171168
        %v1191 = vunpack.c.0.s8 %v1190
        %v1192 = vlaneseq
        %v1193 = vshrl.u32 %v1192, 7
        %v1194 = vsub.s32 %v1191, %v1193
        %v1195 = vrot.slane %v1187, %v1194
        %v1197 = vunpack.c.l.s4 1966171168
        %v1198 = vunpack.c.0.s8 %v1197
        %v1199 = vlaneseq
        %v1200 = vshrl.u32 %v1199, 7
        %v1201 = vsub.s32 %v1198, %v1200
        %v1202 = vrot.slane %v1188, %v1201
        %v1203 = vcombine.low %v1195, %v1202
        %v1205 = vunpack.c.l.s4 1966171168
        %v1206 = vunpack.c.0.s8 %v1205
        %v1207 = vlaneseq
        %v1208 = vshrl.u32 %v1207, 7
        %v1209 = vsub.s32 %v1206, %v1208
        %v1210 = vrot.slane %v1203, %v1209
        %v1212 = vlaneseq
        %vm1213 = vcmp.ge.s32.totalorder %v1212, 0
        %vm1214 = vcmp.lt.s32.totalorder %v1212, 512
        %vm1215 = vmand %vm1213, %vm1214
        %1216 = vst.msk [vmem:[%s286] sm:$0xf] %vm1215, %v1210
        %s1217 = sand.u32 %s183, 1
        %s1218 = scalar_lea.sflag [#allocation4], %s1217
        %s1219 = sand.u32 %s183, 1
        %s1220 = smul.addr %s1219, 4
        %s1221 = scalar_lea.vmem [#allocation3], %s1220
        // Predicated region
        $region49: #{tpu_custom_call.1} parent=47 // pred_check
          %p1222 = pneg %p193
        $region50: #{tpu_custom_call.1} parent=47 // pred_check_branch
          %1224 = sbr.rel (%p1222) target = $region52
        $region51: #{tpu_custom_call.1} parent=47 // pred_region
          %s1225 = smul.u32 4, %s23
          %s1227 = ssub.s32 64, 64
          %1228 = vsyncadd %s1218, %s1227
          %s1229 = smul.addr %s1225, 16
          %s1230 = scalar_lea.hbm %s7, %s1229
          %s1232 = sshll.u32 %s1221, 4
          %s1233 = int_to_ptr.vmem [resolvable:$true] %s1232
          %1235 = dma.vmem_to_hbm [thread:$0]  %s1233, 64, %s1230, %s1218
        $region52: #{tpu_custom_call.1} parent=47 // pred_fallthru
          _
      $region48: #{tpu_custom_call.1} parent=5 // pred_fallthru
        _
      %p1236 = scmp.le.s32.totalorder 2, %s18
      // Predicated region
      $region53: #{tpu_custom_call.1} parent=5 // pred_check
        %p1237 = pneg %p1236
      $region54: #{tpu_custom_call.1} parent=5 // pred_check_branch
        %1239 = sbr.rel (%p1237) target = $region56
      $region55: #{tpu_custom_call.1} parent=5 // pred_region
        %s1240 = ssub.s32 %s18, 2
        // Predicated region
        $region57: #{tpu_custom_call.1} parent=55 // pred_check
          %p1241 = pneg %p199
        $region58: #{tpu_custom_call.1} parent=55 // pred_check_branch
          %1243 = sbr.rel (%p1241) target = $region60
        $region59: #{tpu_custom_call.1} parent=55 // pred_region
          %s1244 = sand.u32 %s184, 1
          %s1245 = scalar_lea.sflag [#allocation4], %s1244
          %s1246 = sand.u32 %s184, 1
          %s1247 = smul.addr %s1246, 4
          %s1248 = scalar_lea.vmem [#allocation3], %s1247
          %1249 = dma.done %s1245, 64
        $region60: #{tpu_custom_call.1} parent=55 // pred_fallthru
          _
      $region56: #{tpu_custom_call.1} parent=5 // pred_fallthru
        _
    $region6: #{tpu_custom_call.1} parent=1 // loop_footer
      %s22 = sadd.s32 1, %s18
    $region7: #{tpu_custom_call.1} parent=1 // loop_footer_branch
      %17 = sbr.rel target = $region3
    $region8: #{tpu_custom_call.1} parent=1 // loop_exit
      _
    %1250 = vsyncpa [#allocation4], 1
    %s1251 = scalar_lea.sflag [#allocation4], 1
    %1252 = vsyncpa %s1251, 1

</llo_original>
